<compile_context>
chip_gen: v5e
topology: v5e:2x2
jax: 0.10.0
libtpu: 0.0.40
codegen_flags: <defaults>
</compile_context>

<pallas_src>
import functools

import jax
import jax.numpy as jnp
from jax.experimental import pallas as pl
from jax.experimental.pallas import tpu as pltpu


LANE = 128
_SINGLE_BUFFER_PARAM_THRESHOLD = 8 * 2**20  # only bother with Buffered(1) above this


def _round_up(n, m):
    return ((n + m - 1) // m) * m


def _pad2d(a, rows, cols):
    r, c = a.shape
    if r == rows and c == cols:
        return a
    return jnp.pad(a, ((0, rows - r), (0, cols - c)))


def _pick_batch_tile(batch, sublane, target=512):
    """Largest tile <= target rows, multiple of `sublane`.

    No forced split: on 1-TC chips (v5e/v6e) the grid is a serial loop, so splitting a
    batch that already fits one tile only adds ~0.35us/step overhead and shrinks the
    MXU M dimension. Batches larger than `target` still tile (pipelines DMA/compute).
    """
    return _round_up(min(batch, target), sublane)


def _vmem_capacity_bytes():
    try:
        return int(pltpu.get_tpu_info().vmem_capacity_bytes)
    except Exception:  # hardware query only; default to the 128 MiB of v5e/v6e
        return 128 * 2**20


# --------------------------------------------------------------------------- kernel ---


def _cell_kernel(num_layers, mxu_dtype, *refs):
    # refs = (x_ref, w0, b0, w1, b1, ..., out_ref)
    x_ref = refs[0]
    out_ref = refs[-1]
    wb = refs[1:-1]

    h = x_ref[...].astype(jnp.float32)          # activations live in f32 between layers
    for i in range(num_layers):
        w = wb[2 * i][...]
        b = wb[2 * i + 1][...]
        # MXU operands in mxu_dtype (bf16 => 1 pass on v6e/v7x; f32 => exact, ~3x passes),
        # accumulation + bias + ReLU always in f32.
        acc = jnp.dot(h.astype(mxu_dtype), w.astype(mxu_dtype),
                      preferred_element_type=jnp.float32)
        h = jnp.maximum(acc + b.astype(jnp.float32), 0.0)
    out_ref[...] = h.astype(out_ref.dtype)


# -------------------------------------------------------------------------- wrappers ---


def prepare_cell_params(weights, biases, param_dtype=None):
    """One-time parameter preparation (hoisted out of the per-call path).

    Pads only the *hidden* feature dims up to 128-lane multiples (input/output dims stay
    unpadded so x and the kernel output need no host-side pad/slice) and optionally casts
    the parameters (use jnp.bfloat16 for v6e/v7x: bf16-native MXU, half the resident VMEM).
    Zero padding is exact: padded hidden columns get zero weight cols + zero bias, ReLU
    keeps them 0, and the matching padded weight rows of the next layer are zero.
    """
    num_layers = len(weights)
    assert num_layers == len(biases) and num_layers >= 1
    dims = [weights[0].shape[0]] + [w.shape[1] for w in weights]
    for i in range(num_layers - 1):
        assert weights[i].shape[1] == weights[i + 1].shape[0]
    dims_p = [dims[0]] + [_round_up(d, LANE) for d in dims[1:-1]] + [dims[-1]]

    weights_p, biases_p = [], []
    for i, (w, b) in enumerate(zip(weights, biases)):
        w = jnp.asarray(w)
        b = jnp.asarray(b).reshape(1, -1)
        if param_dtype is not None:
            w = w.astype(param_dtype)
            b = b.astype(param_dtype)
        weights_p.append(_pad2d(w, dims_p[i], dims_p[i + 1]))
        biases_p.append(_pad2d(b, 1, dims_p[i + 1]))
    return tuple(weights_p), tuple(biases_p)


def cell_forward(x, weights_p, biases_p, *, mxu_dtype=None, batch_tile=None):
    """Run the SearchCell MLP chain as one Pallas kernel.

    x:         [B, dim]
    weights_p: tuple of pre-padded [din_i, dout_i] (from prepare_cell_params)
    biases_p:  tuple of pre-padded [1, dout_i]
    mxu_dtype: dtype of the MXU operands; defaults to x.dtype (accumulation is f32).
               Pass jnp.bfloat16 with f32 inputs to trade exactness for ~3x MXU throughput.
    """
    num_layers = len(weights_p)
    B, dim = x.shape
    assert weights_p[0].shape[0] == dim
    out_dim = weights_p[-1].shape[1]
    dims_p = [dim] + [w.shape[1] for w in weights_p]

    dtype = x.dtype
    if mxu_dtype is None:
        mxu_dtype = dtype
    itemsize = jnp.dtype(dtype).itemsize
    sublane = {4: 8, 2: 16, 1: 32}.get(itemsize, 8)

    # --- batch tiling (rows only; feature dims never padded on the host) ---
    bt = batch_tile if batch_tile is not None else _pick_batch_tile(B, sublane)
    assert bt % sublane == 0, "batch_tile must be a multiple of the sublane count"
    Bp = _round_up(B, bt)
    grid = (Bp // bt,)
    x_in = x if Bp == B else jnp.pad(x, ((0, Bp - B), (0, 0)))

    # --- VMEM budget (cap below physical; >64 MiB allowed on 128 MiB chips) ---
    param_bytes = sum(int(w.size) * w.dtype.itemsize + int(b.size) * b.dtype.itemsize
                      for w, b in zip(weights_p, biases_p))
    single_buffer_params = param_bytes > _SINGLE_BUFFER_PARAM_THRESHOLD
    param_resident = param_bytes if single_buffer_params else 2 * param_bytes
    est_vmem = (2 * bt * (dim + out_dim) * itemsize      # double-buffered x / out tiles
                + param_resident                          # resident params
                + 3 * bt * max(dims_p) * 4)               # fp32 intermediates headroom
    cap = _vmem_capacity_bytes()
    vmem_limit = int(min(int(0.85 * cap), max(32 * 2**20, int(1.5 * est_vmem))))

    cost = pl.CostEstimate(
        flops=int(2 * Bp * sum(dims_p[i] * dims_p[i + 1] for i in range(num_layers))),
        transcendentals=0,
        bytes_accessed=int((Bp * dim + Bp * out_dim) * itemsize + param_bytes),
    )

    operands = [x_in]
    for w, b in zip(weights_p, biases_p):
        operands += [w, b]

    def _build(single_buffer):
        def const_spec(shape):
            if single_buffer:
                # Grid-invariant params: one buffer instead of the default 2-deep pipeline.
                return pl.BlockSpec(shape, lambda i: (0, 0),
                                    pipeline_mode=pl.Buffered(1))
            return pl.BlockSpec(shape, lambda i: (0, 0))

        in_specs = [pl.BlockSpec((bt, dim), lambda i: (i, 0))]
        for w, b in zip(weights_p, biases_p):
            in_specs.append(const_spec(w.shape))
            in_specs.append(const_spec(b.shape))
        out_spec = pl.BlockSpec((bt, out_dim), lambda i: (i, 0))

        return pl.pallas_call(
            functools.partial(_cell_kernel, num_layers, mxu_dtype),
            out_shape=jax.ShapeDtypeStruct((Bp, out_dim), dtype),
            grid_spec=pltpu.PrefetchScalarGridSpec(
                num_scalar_prefetch=0,
                grid=grid,
                in_specs=in_specs,
                out_specs=out_spec,
            ),
            compiler_params=pltpu.CompilerParams(
                dimension_semantics=("parallel",),
                vmem_limit_bytes=vmem_limit,
            ),
            cost_estimate=cost,
        )

    if single_buffer_params:
        try:
            y_p = _build(True)(*operands)
        except (TypeError, NotImplementedError, pltpu.LoweringException):
            # Only if pl.Buffered(1) itself is rejected by this jax/libtpu combo do we fall
            # back to default buffering; genuine VMEM OOMs / lowering bugs propagate.
            y_p = _build(False)(*operands)
    else:
        y_p = _build(False)(*operands)

    return y_p if Bp == B else y_p[:B]


# ------------------------------------------------------------------------ reference ---


def cell_reference(x, weights, biases):
    h = x.astype(jnp.float32)
    for w, b in zip(weights, biases):
        h = jnp.maximum(h @ w.astype(jnp.float32) + b.astype(jnp.float32), 0.0)
    return h.astype(jnp.float32)


def init_cell_params(key, dim, num_layers, hidden_dim=None, out_dim=None):
    """Deterministic synthetic init mirroring SearchCell.__init__'s dimension logic."""
    if hidden_dim is None:
        hidden_dim = dim
    if out_dim is None:
        out_dim = dim
    weights, biases = [], []
    for i in range(num_layers):
        if i == 0:
            d1, d2 = dim, hidden_dim
        elif i == num_layers - 1:
            d1, d2 = hidden_dim, out_dim
        else:
            d1, d2 = hidden_dim, hidden_dim
        key, wk, bk = jax.random.split(key, 3)
        scale = 1.0 / jnp.sqrt(jnp.float32(d1))
        weights.append(jax.random.uniform(wk, (d1, d2), jnp.float32, -scale, scale))
        biases.append(jax.random.uniform(bk, (d2,), jnp.float32, -scale, scale))
    return weights, biases


if __name__ == "__main__":
    key = jax.random.PRNGKey(0)
    key, xk = jax.random.split(key)

    # Small shapes consistent with the module: SearchCell(dim_mlp, num_layers=4),
    # i.e. a 4-layer chain dim -> hidden -> hidden -> hidden -> out.
    batch, dim, hidden, out = 32, 32, 32, 32
    num_layers = 4

    x = jax.random.normal(xk, (batch, dim), jnp.float32)
    weights, biases = init_cell_params(key, dim, num_layers, hidden_dim=hidden, out_dim=out)
    y_ref = cell_reference(x, weights, biases)

    # f32 path: exact (f32 MXU operands, f32 accumulate). Params prepared once, reused.
    wp, bp = prepare_cell_params(weights, biases)
    y = jax.block_until_ready(cell_forward(x, wp, bp))
    assert y.shape == (batch, out)
    assert jnp.allclose(y.astype(jnp.float32), y_ref, atol=1e-5, rtol=1e-5), "f32 mismatch"
    # second call reuses the cached padded params (no per-call pad/cast work)
    y2 = jax.block_until_ready(cell_forward(x, wp, bp))
    assert jnp.allclose(y2.astype(jnp.float32), y_ref, atol=1e-5, rtol=1e-5)

    # bf16 path: bf16 params / bf16 MXU operands, f32 accumulate, f32 intermediates
    # between layers (less lossy than storing bf16 activations).
    wp16, bp16 = prepare_cell_params(weights, biases, param_dtype=jnp.bfloat16)
    yb = jax.block_until_ready(cell_forward(x.astype(jnp.bfloat16), wp16, bp16))
    assert yb.shape == (batch, out)
    assert jnp.allclose(yb.astype(jnp.float32), y_ref, atol=0.1, rtol=0.1), "bf16 mismatch"

    print("KERNEL_OK")
</pallas_src>

<mosaic_0001>
module attributes {stable_mosaic.version = 11 : i64} {
  func.func @_cell_kernel(%arg0: i32, %arg1: memref<32x32xf32, #tpu.memory_space<vmem>>, %arg2: memref<32x128xf32, #tpu.memory_space<vmem>>, %arg3: memref<1x128xf32, #tpu.memory_space<vmem>>, %arg4: memref<128x128xf32, #tpu.memory_space<vmem>>, %arg5: memref<1x128xf32, #tpu.memory_space<vmem>>, %arg6: memref<128x128xf32, #tpu.memory_space<vmem>>, %arg7: memref<1x128xf32, #tpu.memory_space<vmem>>, %arg8: memref<128x32xf32, #tpu.memory_space<vmem>>, %arg9: memref<1x32xf32, #tpu.memory_space<vmem>>, %arg10: memref<32x32xf32, #tpu.memory_space<vmem>>) attributes {dimension_semantics = [#tpu.dimension_semantics<parallel>], iteration_bounds = array<i64: 1>, scalar_prefetch = 0 : i64, scratch_operands = 0 : i64, tpu.core_type = #tpu.core_type<tc>, window_params = [{transform_indices = @transform_0, window_bounds = array<i64: 32, 32>}, {pipeline_mode = #tpu.pipeline_mode<synchronous>, transform_indices = @transform_1, window_bounds = array<i64: 32, 128>}, {pipeline_mode = #tpu.pipeline_mode<synchronous>, transform_indices = @transform_2, window_bounds = array<i64: 1, 128>}, {pipeline_mode = #tpu.pipeline_mode<synchronous>, transform_indices = @transform_3, window_bounds = array<i64: 128, 128>}, {pipeline_mode = #tpu.pipeline_mode<synchronous>, transform_indices = @transform_4, window_bounds = array<i64: 1, 128>}, {pipeline_mode = #tpu.pipeline_mode<synchronous>, transform_indices = @transform_5, window_bounds = array<i64: 128, 128>}, {pipeline_mode = #tpu.pipeline_mode<synchronous>, transform_indices = @transform_6, window_bounds = array<i64: 1, 128>}, {pipeline_mode = #tpu.pipeline_mode<synchronous>, transform_indices = @transform_7, window_bounds = array<i64: 128, 32>}, {pipeline_mode = #tpu.pipeline_mode<synchronous>, transform_indices = @transform_8, window_bounds = array<i64: 1, 32>}, {transform_indices = @transform_9, window_bounds = array<i64: 32, 32>}]} {
    %c0 = arith.constant 0 : index
    %c0_0 = arith.constant 0 : index
    %0 = vector.load %arg1[%c0, %c0_0] : memref<32x32xf32, #tpu.memory_space<vmem>>, vector<32x32xf32>
    %c0_1 = arith.constant 0 : index
    %c0_2 = arith.constant 0 : index
    %1 = vector.load %arg2[%c0_1, %c0_2] : memref<32x128xf32, #tpu.memory_space<vmem>>, vector<32x128xf32>
    %c0_3 = arith.constant 0 : index
    %c0_4 = arith.constant 0 : index
    %2 = vector.load %arg3[%c0_3, %c0_4] : memref<1x128xf32, #tpu.memory_space<vmem>>, vector<1x128xf32>
    %cst = arith.constant dense<0.000000e+00> : vector<32x128xf32>
    %3 = tpu.matmul %0, %1, %cst {dimension_numbers = #tpu.dot_dimension_numbers<[1], [0], [0], [1], [0, 0, 1, 1], [], []>} : vector<32x32xf32>, vector<32x128xf32>, vector<32x128xf32> -> vector<32x128xf32>
    %4 = vector.broadcast %2 : vector<1x128xf32> to vector<32x128xf32>
    %5 = arith.addf %3, %4 : vector<32x128xf32>
    %cst_5 = arith.constant 0.000000e+00 : f32
    %6 = vector.broadcast %cst_5 : f32 to vector<32x128xf32>
    %7 = arith.maximumf %5, %6 : vector<32x128xf32>
    %c0_6 = arith.constant 0 : index
    %c0_7 = arith.constant 0 : index
    %8 = vector.load %arg4[%c0_6, %c0_7] : memref<128x128xf32, #tpu.memory_space<vmem>>, vector<128x128xf32>
    %c0_8 = arith.constant 0 : index
    %c0_9 = arith.constant 0 : index
    %9 = vector.load %arg5[%c0_8, %c0_9] : memref<1x128xf32, #tpu.memory_space<vmem>>, vector<1x128xf32>
    %cst_10 = arith.constant dense<0.000000e+00> : vector<32x128xf32>
    %10 = tpu.matmul %7, %8, %cst_10 {dimension_numbers = #tpu.dot_dimension_numbers<[1], [0], [0], [1], [0, 0, 1, 1], [], []>} : vector<32x128xf32>, vector<128x128xf32>, vector<32x128xf32> -> vector<32x128xf32>
    %11 = vector.broadcast %9 : vector<1x128xf32> to vector<32x128xf32>
    %12 = arith.addf %10, %11 : vector<32x128xf32>
    %cst_11 = arith.constant 0.000000e+00 : f32
    %13 = vector.broadcast %cst_11 : f32 to vector<32x128xf32>
    %14 = arith.maximumf %12, %13 : vector<32x128xf32>
    %c0_12 = arith.constant 0 : index
    %c0_13 = arith.constant 0 : index
    %15 = vector.load %arg6[%c0_12, %c0_13] : memref<128x128xf32, #tpu.memory_space<vmem>>, vector<128x128xf32>
    %c0_14 = arith.constant 0 : index
    %c0_15 = arith.constant 0 : index
    %16 = vector.load %arg7[%c0_14, %c0_15] : memref<1x128xf32, #tpu.memory_space<vmem>>, vector<1x128xf32>
    %cst_16 = arith.constant dense<0.000000e+00> : vector<32x128xf32>
    %17 = tpu.matmul %14, %15, %cst_16 {dimension_numbers = #tpu.dot_dimension_numbers<[1], [0], [0], [1], [0, 0, 1, 1], [], []>} : vector<32x128xf32>, vector<128x128xf32>, vector<32x128xf32> -> vector<32x128xf32>
    %18 = vector.broadcast %16 : vector<1x128xf32> to vector<32x128xf32>
    %19 = arith.addf %17, %18 : vector<32x128xf32>
    %cst_17 = arith.constant 0.000000e+00 : f32
    %20 = vector.broadcast %cst_17 : f32 to vector<32x128xf32>
    %21 = arith.maximumf %19, %20 : vector<32x128xf32>
    %c0_18 = arith.constant 0 : index
    %c0_19 = arith.constant 0 : index
    %22 = vector.load %arg8[%c0_18, %c0_19] : memref<128x32xf32, #tpu.memory_space<vmem>>, vector<128x32xf32>
    %c0_20 = arith.constant 0 : index
    %c0_21 = arith.constant 0 : index
    %23 = vector.load %arg9[%c0_20, %c0_21] : memref<1x32xf32, #tpu.memory_space<vmem>>, vector<1x32xf32>
    %cst_22 = arith.constant dense<0.000000e+00> : vector<32x32xf32>
    %24 = tpu.matmul %21, %22, %cst_22 {dimension_numbers = #tpu.dot_dimension_numbers<[1], [0], [0], [1], [0, 0, 1, 1], [], []>} : vector<32x128xf32>, vector<128x32xf32>, vector<32x32xf32> -> vector<32x32xf32>
    %25 = vector.broadcast %23 : vector<1x32xf32> to vector<32x32xf32>
    %26 = arith.addf %24, %25 : vector<32x32xf32>
    %cst_23 = arith.constant 0.000000e+00 : f32
    %27 = vector.broadcast %cst_23 : f32 to vector<32x32xf32>
    %28 = arith.maximumf %26, %27 : vector<32x32xf32>
    %c0_24 = arith.constant 0 : index
    %c0_25 = arith.constant 0 : index
    %29 = vector.load %arg10[%c0_24, %c0_25] : memref<32x32xf32, #tpu.memory_space<vmem>>, vector<32x32xf32>
    tpu.vector_store %arg10[%c0_24, %c0_25], %28 {strides = array<i32>} : memref<32x32xf32, #tpu.memory_space<vmem>>, vector<32x32xf32>,
    return
  }
  func.func @transform_0(%arg0: i32) -> (i32, i32) {
    %c0_i32 = arith.constant 0 : i32
    %c0_i32_0 = arith.constant 0 : i32
    return %arg0, %c0_i32 : i32, i32
  }
  func.func @transform_1(%arg0: i32) -> (i32, i32) {
    %c0_i32 = arith.constant 0 : i32
    %c0_i32_0 = arith.constant 0 : i32
    %c0_i32_1 = arith.constant 0 : i32
    return %c0_i32, %c0_i32_0 : i32, i32
  }
  func.func @transform_2(%arg0: i32) -> (i32, i32) {
    %c0_i32 = arith.constant 0 : i32
    %c0_i32_0 = arith.constant 0 : i32
    %c0_i32_1 = arith.constant 0 : i32
    return %c0_i32, %c0_i32_0 : i32, i32
  }
  func.func @transform_3(%arg0: i32) -> (i32, i32) {
    %c0_i32 = arith.constant 0 : i32
    %c0_i32_0 = arith.constant 0 : i32
    %c0_i32_1 = arith.constant 0 : i32
    return %c0_i32, %c0_i32_0 : i32, i32
  }
  func.func @transform_4(%arg0: i32) -> (i32, i32) {
    %c0_i32 = arith.constant 0 : i32
    %c0_i32_0 = arith.constant 0 : i32
    %c0_i32_1 = arith.constant 0 : i32
    return %c0_i32, %c0_i32_0 : i32, i32
  }
  func.func @transform_5(%arg0: i32) -> (i32, i32) {
    %c0_i32 = arith.constant 0 : i32
    %c0_i32_0 = arith.constant 0 : i32
    %c0_i32_1 = arith.constant 0 : i32
    return %c0_i32, %c0_i32_0 : i32, i32
  }
  func.func @transform_6(%arg0: i32) -> (i32, i32) {
    %c0_i32 = arith.constant 0 : i32
    %c0_i32_0 = arith.constant 0 : i32
    %c0_i32_1 = arith.constant 0 : i32
    return %c0_i32, %c0_i32_0 : i32, i32
  }
  func.func @transform_7(%arg0: i32) -> (i32, i32) {
    %c0_i32 = arith.constant 0 : i32
    %c0_i32_0 = arith.constant 0 : i32
    %c0_i32_1 = arith.constant 0 : i32
    return %c0_i32, %c0_i32_0 : i32, i32
  }
  func.func @transform_8(%arg0: i32) -> (i32, i32) {
    %c0_i32 = arith.constant 0 : i32
    %c0_i32_0 = arith.constant 0 : i32
    %c0_i32_1 = arith.constant 0 : i32
    return %c0_i32, %c0_i32_0 : i32, i32
  }
  func.func @transform_9(%arg0: i32) -> (i32, i32) {
    %c0_i32 = arith.constant 0 : i32
    %c0_i32_0 = arith.constant 0 : i32
    return %arg0, %c0_i32 : i32, i32
  }
}

</mosaic_0001>

<llo_original>
// kernel: tpu_custom_call.1
$region0: #{tpu_custom_call.1}
  #allocation0 [shape = 'u32[]', space=smem, size = 0x4, offset = 0x4, fixed_abs, tag = 'smem constant byte address 0x4 - core index']
  #allocation1 [shape = 'u32[72,128]{1,0:T(1,128)}', space=vmem, size = 0x9000, scoped, tag = 'internal scratch']
  %s0 = inlined_call_operand.vmem [shape: f32[32,32], index: 0, kind: input, shape index: {}]
  %s1 = inlined_call_operand.hbm [shape: f32[32,128], index: 1, kind: input, shape index: {}]
  %s2 = inlined_call_operand.vmem [shape: f32[1,128], index: 2, kind: input, shape index: {}]
  %s3 = inlined_call_operand.vmem [shape: f32[128,128], index: 3, kind: input, shape index: {}]
  %s4 = inlined_call_operand.vmem [shape: f32[1,128], index: 4, kind: input, shape index: {}]
  %s5 = inlined_call_operand.hbm [shape: f32[128,128], index: 5, kind: input, shape index: {}]
  %s6 = inlined_call_operand.vmem [shape: f32[1,128], index: 6, kind: input, shape index: {}]
  %s7 = inlined_call_operand.vmem [shape: f32[128,32], index: 7, kind: input, shape index: {}]
  %s8 = inlined_call_operand.vmem [shape: f32[1,32], index: 8, kind: input, shape index: {}]
  %s9 = inlined_call_operand.hbm [shape: f32[32,32], index: 9, kind: output, shape index: {}]
  %s10 = sld [smem:[#allocation0]]
  $region54: #{tpu_custom_call.1} parent=0
    _
  %s12 = ssub.s32 1, %s10
  %s13 = scalar_select 0, %s12, %s10
  $region1: #{tpu_custom_call.1} parent=0
    #allocation2 [shape = 'u8[16384]{0}', space=vmem, size = 0x4000, scoped, tag = 'input window, operand 1, single buffered']
    #allocation3 [shape = 's32[1]{0}', space=sflag, size = 0x4, scoped, tag = 'scoped memory for tpu_custom_call.1']
    #allocation4 [shape = 's32[1]{0}', space=sflag, size = 0x4, scoped, tag = 'scoped memory for tpu_custom_call.1']
    #allocation5 [shape = 'u8[65536]{0}', space=vmem, size = 0x10000, scoped, tag = 'input window, operand 5, single buffered']
    #allocation6 [shape = 's32[1]{0}', space=sflag, size = 0x4, scoped, tag = 'scoped memory for tpu_custom_call.1']
    #allocation7 [shape = 'u8[16384]{0}', space=vmem, size = 0x4000, scoped, tag = 'output window, operand 0, single buffered']
    %14 = vsyncpa [#allocation3], 0
    %15 = vsyncpa [#allocation6], 0
    %16 = vsyncpa [#allocation4], 0
    // Predicated region
    $region2: #{tpu_custom_call.1} parent=1 // pred_check
      _
    $region3: #{tpu_custom_call.1} parent=1 // pred_check_branch
      %18 = sbr.rel (0) target = $region5
    $region4: #{tpu_custom_call.1} parent=1 // pred_region
      _
    $region5: #{tpu_custom_call.1} parent=1 // pred_fallthru
      _
    // Predicated region
    $region6: #{tpu_custom_call.1} parent=1 // pred_check
      _
    $region7: #{tpu_custom_call.1} parent=1 // pred_check_branch
      %20 = sbr.rel (0) target = $region9
    $region8: #{tpu_custom_call.1} parent=1 // pred_region
      %22 = vsyncadd [#allocation3], 0
      %s23 = sshll.u32 %s1, 4
      %s24 = int_to_ptr.hbm [resolvable:$true] %s23
      %s25 = sshll.u32 [#allocation2], 4
      %s26 = int_to_ptr.vmem [resolvable:$true] %s25
      %31 = dma.hbm_to_vmem [thread:$0]  %s24, 512, %s26, [#allocation3], 128, 128, 8
    $region9: #{tpu_custom_call.1} parent=1 // pred_fallthru
      _
    // Predicated region
    $region10: #{tpu_custom_call.1} parent=1 // pred_check
      _
    $region11: #{tpu_custom_call.1} parent=1 // pred_check_branch
      %33 = sbr.rel (0) target = $region13
    $region12: #{tpu_custom_call.1} parent=1 // pred_region
      _
    $region13: #{tpu_custom_call.1} parent=1 // pred_fallthru
      _
    // Predicated region
    $region14: #{tpu_custom_call.1} parent=1 // pred_check
      _
    $region15: #{tpu_custom_call.1} parent=1 // pred_check_branch
      %35 = sbr.rel (0) target = $region17
    $region16: #{tpu_custom_call.1} parent=1 // pred_region
      _
    $region17: #{tpu_custom_call.1} parent=1 // pred_fallthru
      _
    // Predicated region
    $region18: #{tpu_custom_call.1} parent=1 // pred_check
      _
    $region19: #{tpu_custom_call.1} parent=1 // pred_check_branch
      %37 = sbr.rel (0) target = $region21
    $region20: #{tpu_custom_call.1} parent=1 // pred_region
      _
    $region21: #{tpu_custom_call.1} parent=1 // pred_fallthru
      _
    // Predicated region
    $region22: #{tpu_custom_call.1} parent=1 // pred_check
      _
    $region23: #{tpu_custom_call.1} parent=1 // pred_check_branch
      %39 = sbr.rel (0) target = $region25
    $region24: #{tpu_custom_call.1} parent=1 // pred_region
      %41 = vsyncadd [#allocation6], 0
      %s42 = sshll.u32 %s5, 4
      %s43 = int_to_ptr.hbm [resolvable:$true] %s42
      %s44 = sshll.u32 [#allocation5], 4
      %s45 = int_to_ptr.vmem [resolvable:$true] %s44
      %50 = dma.hbm_to_vmem [thread:$0]  %s43, 2048, %s45, [#allocation6], 128, 128, 8
    $region25: #{tpu_custom_call.1} parent=1 // pred_fallthru
      _
    // Predicated region
    $region26: #{tpu_custom_call.1} parent=1 // pred_check
      _
    $region27: #{tpu_custom_call.1} parent=1 // pred_check_branch
      %52 = sbr.rel (0) target = $region29
    $region28: #{tpu_custom_call.1} parent=1 // pred_region
      _
    $region29: #{tpu_custom_call.1} parent=1 // pred_fallthru
      _
    // Predicated region
    $region30: #{tpu_custom_call.1} parent=1 // pred_check
      _
    $region31: #{tpu_custom_call.1} parent=1 // pred_check_branch
      %54 = sbr.rel (0) target = $region33
    $region32: #{tpu_custom_call.1} parent=1 // pred_region
      _
    $region33: #{tpu_custom_call.1} parent=1 // pred_fallthru
      _
    // Predicated region
    $region34: #{tpu_custom_call.1} parent=1 // pred_check
      _
    $region35: #{tpu_custom_call.1} parent=1 // pred_check_branch
      %56 = sbr.rel (0) target = $region37
    $region36: #{tpu_custom_call.1} parent=1 // pred_region
      _
    $region37: #{tpu_custom_call.1} parent=1 // pred_fallthru
      _
    // Predicated region
    $region38: #{tpu_custom_call.1} parent=1 // pred_check
      _
    $region39: #{tpu_custom_call.1} parent=1 // pred_check_branch
      %58 = sbr.rel (0) target = $region41
    $region40: #{tpu_custom_call.1} parent=1 // pred_region
      %60 = dma.done [#allocation3], 512
    $region41: #{tpu_custom_call.1} parent=1 // pred_fallthru
      _
    // Predicated region
    $region42: #{tpu_custom_call.1} parent=1 // pred_check
      _
    $region43: #{tpu_custom_call.1} parent=1 // pred_check_branch
      %62 = sbr.rel (0) target = $region45
    $region44: #{tpu_custom_call.1} parent=1 // pred_region
      %64 = dma.done [#allocation6], 2048
    $region45: #{tpu_custom_call.1} parent=1 // pred_fallthru
      _
    %v65 = vld [vmem:[%s0] sm:$0xff]
    %v66 = vld [vmem:[%s0 + $0x8] sm:$0xff]
    %v67 = vld [vmem:[%s0 + $0x10] sm:$0xff]
    %v68 = vld [vmem:[%s0 + $0x18] sm:$0xff]
    %v69 = vld [vmem:[#allocation2] sm:$0xff]
    %v70 = vld [vmem:[#allocation2 + $0x8] sm:$0xff]
    %v71 = vld [vmem:[#allocation2 + $0x10] sm:$0xff]
    %v72 = vld [vmem:[#allocation2 + $0x18] sm:$0xff]
    %v73 = vld [vmem:[%s2] sm:$0x1]
    %v75 = vperm.slane %v73, 0
    %vm77 = vcmask 261120
    %v79 = vsel %vm77, %v65, 0
    %v82 = vsel %vm77, %v66, 0
    %v85 = vsel %vm77, %v67, 0
    %v88 = vsel %vm77, %v68, 0
    %90 = vmatpush.msra.mxu0 0.0
    %91 = vmatpush.msra.mxu0 0.0
    %92 = vmatpush.msra.mxu0 0.0
    %93 = vmatpush.msra.mxu0 0.0
    %94 = vmatpush.msra.mxu0 0.0
    %95 = vmatpush.msra.mxu0 0.0
    %96 = vmatpush.msra.mxu0 0.0
    %97 = vmatpush.msra.mxu0 0.0
    %98 = vmatpush.msra.mxu0 0.0
    %99 = vmatpush.msra.mxu0 0.0
    %100 = vmatpush.msra.mxu0 0.0
    %101 = vmatpush.msra.mxu0 0.0
    %102 = vmatpush.msra.mxu0 %v72
    %103 = vmatpush.msra.mxu0 %v71
    %104 = vmatpush.msra.mxu0 %v70
    %105 = vmatpush.msra.mxu0 %v69
    %106 = vmatmul.f32.gmra.mxu0 %v79
    %v107 = vpop.f32.mrf.mxu0
    %v108 = vadd.f32 %v75, %v107
    %109 = vmatmul.f32.gmra.mxu0 %v82
    %v110 = vpop.f32.mrf.mxu0
    %v111 = vadd.f32 %v75, %v110
    %112 = vmatmul.f32.gmra.mxu0 %v85
    %v113 = vpop.f32.mrf.mxu0
    %v114 = vadd.f32 %v75, %v113
    %115 = vmatmul.f32.gmra.mxu0 %v88
    %v116 = vpop.f32.mrf.mxu0
    %v117 = vadd.f32 %v75, %v116
    %118 = vdwg.mxu0
    %v119 = vmax.f32 %v108, 0.0
    %v120 = vmax.f32 %v111, 0.0
    %v121 = vmax.f32 %v114, 0.0
    %v122 = vmax.f32 %v117, 0.0
    %v123 = vld [vmem:[%s3] sm:$0xff]
    %v124 = vld [vmem:[%s3 + $0x8] sm:$0xff]
    %v125 = vld [vmem:[%s3 + $0x10] sm:$0xff]
    %v126 = vld [vmem:[%s3 + $0x18] sm:$0xff]
    %v127 = vld [vmem:[%s3 + $0x20] sm:$0xff]
    %v128 = vld [vmem:[%s3 + $0x28] sm:$0xff]
    %v129 = vld [vmem:[%s3 + $0x30] sm:$0xff]
    %v130 = vld [vmem:[%s3 + $0x38] sm:$0xff]
    %v131 = vld [vmem:[%s3 + $0x40] sm:$0xff]
    %v132 = vld [vmem:[%s3 + $0x48] sm:$0xff]
    %v133 = vld [vmem:[%s3 + $0x50] sm:$0xff]
    %v134 = vld [vmem:[%s3 + $0x58] sm:$0xff]
    %v135 = vld [vmem:[%s3 + $0x60] sm:$0xff]
    %v136 = vld [vmem:[%s3 + $0x68] sm:$0xff]
    %v137 = vld [vmem:[%s3 + $0x70] sm:$0xff]
    %v138 = vld [vmem:[%s3 + $0x78] sm:$0xff]
    %v139 = vld [vmem:[%s4] sm:$0x1]
    %v141 = vperm.slane %v139, 0
    %143 = vmatpush.msra.mxu0 %v138
    %144 = vmatpush.msra.mxu0 %v137
    %145 = vmatpush.msra.mxu0 %v136
    %146 = vmatpush.msra.mxu0 %v135
    %147 = vmatpush.msra.mxu0 %v134
    %148 = vmatpush.msra.mxu0 %v133
    %149 = vmatpush.msra.mxu0 %v132
    %150 = vmatpush.msra.mxu0 %v131
    %151 = vmatpush.msra.mxu0 %v130
    %152 = vmatpush.msra.mxu0 %v129
    %153 = vmatpush.msra.mxu0 %v128
    %154 = vmatpush.msra.mxu0 %v127
    %155 = vmatpush.msra.mxu0 %v126
    %156 = vmatpush.msra.mxu0 %v125
    %157 = vmatpush.msra.mxu0 %v124
    %158 = vmatpush.msra.mxu0 %v123
    %159 = vmatmul.f32.gmra.mxu0 %v119
    %v160 = vpop.f32.mrf.mxu0
    %v161 = vadd.f32 %v141, %v160
    %162 = vmatmul.f32.gmra.mxu0 %v120
    %v163 = vpop.f32.mrf.mxu0
    %v164 = vadd.f32 %v141, %v163
    %165 = vmatmul.f32.gmra.mxu0 %v121
    %v166 = vpop.f32.mrf.mxu0
    %v167 = vadd.f32 %v141, %v166
    %168 = vmatmul.f32.gmra.mxu0 %v122
    %v169 = vpop.f32.mrf.mxu0
    %v170 = vadd.f32 %v141, %v169
    %171 = vdwg.mxu0
    %v172 = vmax.f32 %v161, 0.0
    %v173 = vmax.f32 %v164, 0.0
    %v174 = vmax.f32 %v167, 0.0
    %v175 = vmax.f32 %v170, 0.0
    %v176 = vld [vmem:[#allocation5] sm:$0xff]
    %v177 = vld [vmem:[#allocation5 + $0x8] sm:$0xff]
    %v178 = vld [vmem:[#allocation5 + $0x10] sm:$0xff]
    %v179 = vld [vmem:[#allocation5 + $0x18] sm:$0xff]
    %v180 = vld [vmem:[#allocation5 + $0x20] sm:$0xff]
    %v181 = vld [vmem:[#allocation5 + $0x28] sm:$0xff]
    %v182 = vld [vmem:[#allocation5 + $0x30] sm:$0xff]
    %v183 = vld [vmem:[#allocation5 + $0x38] sm:$0xff]
    %v184 = vld [vmem:[#allocation5 + $0x40] sm:$0xff]
    %v185 = vld [vmem:[#allocation5 + $0x48] sm:$0xff]
    %v186 = vld [vmem:[#allocation5 + $0x50] sm:$0xff]
    %v187 = vld [vmem:[#allocation5 + $0x58] sm:$0xff]
    %v188 = vld [vmem:[#allocation5 + $0x60] sm:$0xff]
    %v189 = vld [vmem:[#allocation5 + $0x68] sm:$0xff]
    %v190 = vld [vmem:[#allocation5 + $0x70] sm:$0xff]
    %v191 = vld [vmem:[#allocation5 + $0x78] sm:$0xff]
    %v192 = vld [vmem:[%s6] sm:$0x1]
    %v194 = vperm.slane %v192, 0
    %196 = vmatpush.msra.mxu0 %v191
    %197 = vmatpush.msra.mxu0 %v190
    %198 = vmatpush.msra.mxu0 %v189
    %199 = vmatpush.msra.mxu0 %v188
    %200 = vmatpush.msra.mxu0 %v187
    %201 = vmatpush.msra.mxu0 %v186
    %202 = vmatpush.msra.mxu0 %v185
    %203 = vmatpush.msra.mxu0 %v184
    %204 = vmatpush.msra.mxu0 %v183
    %205 = vmatpush.msra.mxu0 %v182
    %206 = vmatpush.msra.mxu0 %v181
    %207 = vmatpush.msra.mxu0 %v180
    %208 = vmatpush.msra.mxu0 %v179
    %209 = vmatpush.msra.mxu0 %v178
    %210 = vmatpush.msra.mxu0 %v177
    %211 = vmatpush.msra.mxu0 %v176
    %212 = vmatmul.f32.gmra.mxu0 %v172
    %v213 = vpop.f32.mrf.mxu0
    %v214 = vadd.f32 %v194, %v213
    %215 = vmatmul.f32.gmra.mxu0 %v173
    %v216 = vpop.f32.mrf.mxu0
    %v217 = vadd.f32 %v194, %v216
    %218 = vmatmul.f32.gmra.mxu0 %v174
    %v219 = vpop.f32.mrf.mxu0
    %v220 = vadd.f32 %v194, %v219
    %221 = vmatmul.f32.gmra.mxu0 %v175
    %v222 = vpop.f32.mrf.mxu0
    %v223 = vadd.f32 %v194, %v222
    %224 = vdwg.mxu0
    %v225 = vmax.f32 %v214, 0.0
    %v226 = vmax.f32 %v217, 0.0
    %v227 = vmax.f32 %v220, 0.0
    %v228 = vmax.f32 %v223, 0.0
    %v229 = vld [vmem:[%s7] sm:$0xff]
    %v230 = vld [vmem:[%s7 + $0x8] sm:$0xff]
    %v231 = vld [vmem:[%s7 + $0x10] sm:$0xff]
    %v232 = vld [vmem:[%s7 + $0x18] sm:$0xff]
    %v233 = vld [vmem:[%s7 + $0x20] sm:$0xff]
    %v234 = vld [vmem:[%s7 + $0x28] sm:$0xff]
    %v235 = vld [vmem:[%s7 + $0x30] sm:$0xff]
    %v236 = vld [vmem:[%s7 + $0x38] sm:$0xff]
    %v237 = vld [vmem:[%s7 + $0x40] sm:$0xff]
    %v238 = vld [vmem:[%s7 + $0x48] sm:$0xff]
    %v239 = vld [vmem:[%s7 + $0x50] sm:$0xff]
    %v240 = vld [vmem:[%s7 + $0x58] sm:$0xff]
    %v241 = vld [vmem:[%s7 + $0x60] sm:$0xff]
    %v242 = vld [vmem:[%s7 + $0x68] sm:$0xff]
    %v243 = vld [vmem:[%s7 + $0x70] sm:$0xff]
    %v244 = vld [vmem:[%s7 + $0x78] sm:$0xff]
    %v245 = vld [vmem:[%s8] sm:$0x1]
    %v247 = vperm.slane %v245, 0
    %249 = vmatpush.msra.mxu0 %v244
    %250 = vmatpush.msra.mxu0 %v243
    %251 = vmatpush.msra.mxu0 %v242
    %252 = vmatpush.msra.mxu0 %v241
    %253 = vmatpush.msra.mxu0 %v240
    %254 = vmatpush.msra.mxu0 %v239
    %255 = vmatpush.msra.mxu0 %v238
    %256 = vmatpush.msra.mxu0 %v237
    %257 = vmatpush.msra.mxu0 %v236
    %258 = vmatpush.msra.mxu0 %v235
    %259 = vmatpush.msra.mxu0 %v234
    %260 = vmatpush.msra.mxu0 %v233
    %261 = vmatpush.msra.mxu0 %v232
    %262 = vmatpush.msra.mxu0 %v231
    %263 = vmatpush.msra.mxu0 %v230
    %264 = vmatpush.msra.mxu0 %v229
    %265 = vmatmul.f32.gmra.mxu0 %v225
    %v266 = vpop.f32.mrf.mxu0
    %v267 = vadd.f32 %v247, %v266
    %268 = vmatmul.f32.gmra.mxu0 %v226
    %v269 = vpop.f32.mrf.mxu0
    %v270 = vadd.f32 %v247, %v269
    %271 = vmatmul.f32.gmra.mxu0 %v227
    %v272 = vpop.f32.mrf.mxu0
    %v273 = vadd.f32 %v247, %v272
    %274 = vmatmul.f32.gmra.mxu0 %v228
    %v275 = vpop.f32.mrf.mxu0
    %v276 = vadd.f32 %v247, %v275
    %277 = vdwg.mxu0
    %v278 = vmax.f32 %v267, 0.0
    %v279 = vmax.f32 %v270, 0.0
    %v280 = vmax.f32 %v273, 0.0
    %v281 = vmax.f32 %v276, 0.0
    %282 = vst.msk [vmem:[#allocation7] sm:$0xff] %vm77, %v278
    %283 = vst.msk [vmem:[#allocation7 + $0x8] sm:$0xff] %vm77, %v279
    %284 = vst.msk [vmem:[#allocation7 + $0x10] sm:$0xff] %vm77, %v280
    %285 = vst.msk [vmem:[#allocation7 + $0x18] sm:$0xff] %vm77, %v281
    // Predicated region
    $region46: #{tpu_custom_call.1} parent=1 // pred_check
      _
    $region47: #{tpu_custom_call.1} parent=1 // pred_check_branch
      %287 = sbr.rel (0) target = $region49
    $region48: #{tpu_custom_call.1} parent=1 // pred_region
      %289 = vsyncadd [#allocation4], 0
      %s290 = sshll.u32 [#allocation7], 4
      %s291 = int_to_ptr.vmem [resolvable:$true] %s290
      %s292 = sshll.u32 %s9, 4
      %s293 = int_to_ptr.hbm [resolvable:$true] %s292
      %298 = dma.vmem_to_hbm [thread:$0]  %s291, 512, %s293, [#allocation4], 128, 128, 8
    $region49: #{tpu_custom_call.1} parent=1 // pred_fallthru
      _
    // Predicated region
    $region50: #{tpu_custom_call.1} parent=1 // pred_check
      _
    $region51: #{tpu_custom_call.1} parent=1 // pred_check_branch
      %300 = sbr.rel (0) target = $region53
    $region52: #{tpu_custom_call.1} parent=1 // pred_region
      %302 = dma.done [#allocation4], 512
    $region53: #{tpu_custom_call.1} parent=1 // pred_fallthru
      _
    %303 = vsyncpa [#allocation3], 1
    %304 = vsyncpa [#allocation6], 1
    %305 = vsyncpa [#allocation4], 1

</llo_original>
